<compile_context>
chip_gen: v7x
topology: tpu7x:2x2x1
jax: 0.10.0
libtpu: 0.0.40
codegen_flags: <defaults>
</compile_context>

<pallas_src>
import jax
import jax.numpy as jnp
from jax.experimental import pallas as pl
from jax.experimental.pallas import tpu as pltpu

NEG_SLOPE = 0.01  # nn.LeakyReLU default
LANES = 128
H_ACT = 128       # actor hidden width
H_CRI = 32        # critic hidden width

# Output lane layout (inside the single lane-dense output slab).
P0_LANE = 64      # actor prob of action 0
P1_LANE = 65      # actor prob of action 1
V_LANE = 66       # critic value

# Row offsets inside the packed parameter slab (all offsets 8-aligned).
AW1_OFF = 0                      # (4, 128)  actor layer-1 weight (rows = K)
CW1_OFF = 8                      # (4, 32)   critic layer-1 weight, lanes 0:32
W12_OFF = 16                     # (160,128) block-diagonal merged weight:
                                 #   rows   0:128 = aw2 (128,2) -> cols 64:66
                                 #   rows 128:160 = cw2 (32,32) -> cols  0:32
CW3_OFF = W12_OFF + H_ACT + H_CRI        # 176: (32, 32) -> cols 0:32
CW4_OFF = CW3_OFF + H_CRI                # 208: (32, 1)  -> col 66
BIAS_OFF = CW4_OFF + H_CRI               # 240
#   +0 ab1 (128)   +1 cb1 (0:32)   +2 merged bias (ab2@64:66, cb2@0:32)
#   +3 cb3 (0:32)  +4 cb4 (@66)    +5 mask row (1.0 at lanes 64,65)
SLAB_ROWS = 248                          # 246 rounded up to a multiple of 8


def _leaky_relu(x):
    return jnp.where(x >= 0, x, NEG_SLOPE * x)


def actor_critic_kernel(x_ref, w_ref, out_ref):
    x = x_ref[...]                                   # (B, 4) f32

    # Per-feature columns of the state, shared by both K=4 first layers.
    x0 = x[:, 0:1]
    x1 = x[:, 1:2]
    x2 = x[:, 2:3]
    x3 = x[:, 3:4]

    aw1 = w_ref[AW1_OFF:AW1_OFF + 4, :]              # (4, 128)
    cw1 = w_ref[CW1_OFF:CW1_OFF + 4, :]              # (4, 128), lanes 0:32 valid
    ab1 = w_ref[BIAS_OFF + 0:BIAS_OFF + 1, :]        # (1, 128)
    cb1 = w_ref[BIAS_OFF + 1:BIAS_OFF + 2, :]        # (1, 128), lanes 0:32 valid

    # ---- fused first layers (K = 4): VPU broadcast-FMA, MXU skipped ----
    h = _leaky_relu(x0 * aw1[0:1, :] + x1 * aw1[1:2, :]
                    + x2 * aw1[2:3, :] + x3 * aw1[3:4, :] + ab1)   # (B, 128)
    c1 = _leaky_relu(x0 * cw1[0:1, :] + x1 * cw1[1:2, :]
                     + x2 * cw1[2:3, :] + x3 * cw1[3:4, :] + cb1)  # lanes 32+ stay 0

    # ---- merged MXU dot: actor head (128->2) + critic layer-2 (32->32) ----
    lhs = jnp.concatenate([h, c1[:, :H_CRI]], axis=1)              # (B, 160)
    w12 = w_ref[W12_OFF:W12_OFF + H_ACT + H_CRI, :]                # (160, 128)
    b12 = w_ref[BIAS_OFF + 2:BIAS_OFF + 3, :]                      # (1, 128)
    y = jnp.dot(lhs, w12, preferred_element_type=jnp.float32) + b12
    # y: critic layer-2 pre-act at lanes 0:32, actor logits at lanes 64:66,
    #    all other lanes exactly 0.

    # ---- actor: 2-class softmax == in-lane sigmoid of logit differences ----
    # d[lane] = y[lane] - (left neighbor + right neighbor)
    #   lane 64: l0 - (0 + l1) = l0 - l1    lane 65: l1 - (l0 + 0) = l1 - l0
    d = y - (pltpu.roll(y, 1, axis=1) + pltpu.roll(y, LANES - 1, axis=1))
    e = jnp.exp(-jnp.abs(d))                                       # sign-stable sigmoid
    sig = jnp.where(d >= 0, 1.0 / (1.0 + e), e / (1.0 + e))
    mask01 = w_ref[BIAS_OFF + 5:BIAS_OFF + 6, :]                   # 1.0 at lanes 64,65
    probs = sig * mask01                                           # p0@64, p1@65, 0 else

    # ---- critic layers 3 and 4: K=32 MXU dots on the leading 32 lanes ----
    c2 = _leaky_relu(y)                                            # lanes 0:32 valid
    cw3 = w_ref[CW3_OFF:CW3_OFF + H_CRI, :]                        # (32, 128), cols 0:32
    cb3 = w_ref[BIAS_OFF + 3:BIAS_OFF + 4, :]
    c3 = _leaky_relu(
        jnp.dot(c2[:, :H_CRI], cw3, preferred_element_type=jnp.float32) + cb3)

    cw4 = w_ref[CW4_OFF:CW4_OFF + H_CRI, :]                        # (32, 128), col 66
    cb4 = w_ref[BIAS_OFF + 4:BIAS_OFF + 5, :]
    v = jnp.dot(c3[:, :H_CRI], cw4, preferred_element_type=jnp.float32) + cb4
    # v: critic value at lane 66, exact zeros elsewhere.

    # ---- single lane-dense output: p0@64, p1@65, value@66 ----
    out_ref[...] = probs + v


def pack_params(p):
    """Pack all weights/biases into one (248, 128) f32 slab (host-side, once)."""
    slab = jnp.zeros((SLAB_ROWS, LANES), jnp.float32)

    def put(s, r0, c0, arr):
        arr = jnp.asarray(arr, jnp.float32)
        return s.at[r0:r0 + arr.shape[0], c0:c0 + arr.shape[1]].set(arr)

    slab = put(slab, AW1_OFF, 0, p["aw1"])                 # (4, 128)
    slab = put(slab, CW1_OFF, 0, p["cw1"])                 # (4, 32)
    slab = put(slab, W12_OFF, P0_LANE, p["aw2"])           # (128, 2) -> cols 64:66
    slab = put(slab, W12_OFF + H_ACT, 0, p["cw2"])         # (32, 32) -> cols 0:32
    slab = put(slab, CW3_OFF, 0, p["cw3"])                 # (32, 32)
    slab = put(slab, CW4_OFF, V_LANE, p["cw4"])            # (32, 1)  -> col 66
    slab = put(slab, BIAS_OFF + 0, 0, p["ab1"])            # (1, 128)
    slab = put(slab, BIAS_OFF + 1, 0, p["cb1"])            # (1, 32)
    slab = put(slab, BIAS_OFF + 2, P0_LANE, p["ab2"])      # (1, 2)  -> lanes 64:66
    slab = put(slab, BIAS_OFF + 2, 0, p["cb2"])            # (1, 32) same merged row
    slab = put(slab, BIAS_OFF + 3, 0, p["cb3"])            # (1, 32)
    slab = put(slab, BIAS_OFF + 4, V_LANE, p["cb4"])       # (1, 1)  -> lane 66
    slab = slab.at[BIAS_OFF + 5, P0_LANE:P1_LANE + 1].set(1.0)   # prob-lane mask
    return slab


@jax.jit
def actor_critic_forward(state, slab):
    """state: (B, 4) f32.  slab: packed (248, 128) f32 parameter slab."""
    B = state.shape[0]
    pad = (-B) % 8                                   # f32 sublane tile is 8
    if pad:
        state = jnp.pad(state, ((0, pad), (0, 0)))
    vmem = pl.BlockSpec(memory_space=pltpu.MemorySpace.VMEM)
    out = pl.pallas_call(
        actor_critic_kernel,
        out_shape=jax.ShapeDtypeStruct((B + pad, LANES), jnp.float32),
        in_specs=[vmem, vmem],
        out_specs=vmem,
    )(state, slab)
    out = out[:B]
    return out[:, P0_LANE:P1_LANE + 1], out[:, V_LANE:V_LANE + 1]


def init_params(key):
    """Deterministic init; Linear weights stored transposed as (in, out)."""
    def linear(k, fan_in, fan_out):
        kw, kb = jax.random.split(k)
        bound = 1.0 / jnp.sqrt(fan_in)
        w = jax.random.uniform(kw, (fan_in, fan_out), jnp.float32, -bound, bound)
        b = jax.random.uniform(kb, (1, fan_out), jnp.float32, -bound, bound)
        return w, b

    keys = jax.random.split(key, 6)
    aw1, ab1 = linear(keys[0], 4, 128)
    aw2, ab2 = linear(keys[1], 128, 2)
    cw1, cb1 = linear(keys[2], 4, 32)
    cw2, cb2 = linear(keys[3], 32, 32)
    cw3, cb3 = linear(keys[4], 32, 32)
    cw4, cb4 = linear(keys[5], 32, 1)
    return dict(
        aw1=aw1, ab1=ab1, aw2=aw2, ab2=ab2,
        cw1=cw1, cb1=cb1, cw2=cw2, cb2=cb2,
        cw3=cw3, cb3=cb3, cw4=cw4, cb4=cb4,
    )


def reference_forward(state, p):
    """Pure-JAX reference matching the PyTorch module semantics."""
    def leaky(x):
        return jnp.where(x >= 0, x, NEG_SLOPE * x)

    h = leaky(state @ p["aw1"] + p["ab1"])
    logits = h @ p["aw2"] + p["ab2"]
    actor = jax.nn.softmax(logits, axis=-1)

    c = leaky(state @ p["cw1"] + p["cb1"])
    c = leaky(c @ p["cw2"] + p["cb2"])
    c = leaky(c @ p["cw3"] + p["cb3"])
    critic = c @ p["cw4"] + p["cb4"]
    return actor, critic


if __name__ == "__main__":
    key = jax.random.PRNGKey(0)
    k_state, k_params = jax.random.split(key)

    batch = 8
    state = jax.random.normal(k_state, (batch, 4), dtype=jnp.float32)
    params = init_params(k_params)
    slab = pack_params(params)

    actor_probs, critic_value = actor_critic_forward(state, slab)
    actor_probs = jax.block_until_ready(actor_probs)
    critic_value = jax.block_until_ready(critic_value)

    ref_actor, ref_critic = reference_forward(state, params)
    assert actor_probs.shape == (batch, 2)
    assert critic_value.shape == (batch, 1)
    assert jnp.allclose(actor_probs, ref_actor, atol=1e-5, rtol=1e-5)
    assert jnp.allclose(critic_value, ref_critic, atol=1e-5, rtol=1e-5)
    assert jnp.allclose(jnp.sum(actor_probs, axis=-1), 1.0, atol=1e-5)

    print("KERNEL_OK")
</pallas_src>

<mosaic_0001>
module attributes {stable_mosaic.version = 11 : i64} {
  func.func @actor_critic_kernel(%arg0: memref<8x4xf32, #tpu.memory_space<vmem>>, %arg1: memref<248x128xf32, #tpu.memory_space<vmem>>, %arg2: memref<8x128xf32, #tpu.memory_space<vmem>>) attributes {dimension_semantics = [], scalar_prefetch = 0 : i64, scratch_operands = 0 : i64, tpu.core_type = #tpu.core_type<tc>} {
    %c0 = arith.constant 0 : index
    %c0_0 = arith.constant 0 : index
    %0 = vector.load %arg0[%c0, %c0_0] : memref<8x4xf32, #tpu.memory_space<vmem>>, vector<8x4xf32>
    %1 = vector.extract_strided_slice %0 {offsets = [0, 0], sizes = [8, 1], strides = [1, 1]} : vector<8x4xf32> to vector<8x1xf32>
    %2 = vector.extract_strided_slice %0 {offsets = [0, 1], sizes = [8, 1], strides = [1, 1]} : vector<8x4xf32> to vector<8x1xf32>
    %3 = vector.extract_strided_slice %0 {offsets = [0, 2], sizes = [8, 1], strides = [1, 1]} : vector<8x4xf32> to vector<8x1xf32>
    %4 = vector.extract_strided_slice %0 {offsets = [0, 3], sizes = [8, 1], strides = [1, 1]} : vector<8x4xf32> to vector<8x1xf32>
    %c0_1 = arith.constant 0 : index
    %c0_2 = arith.constant 0 : index
    %5 = vector.load %arg1[%c0_1, %c0_2] : memref<248x128xf32, #tpu.memory_space<vmem>>, vector<4x128xf32>
    %c8 = arith.constant 8 : index
    %c0_3 = arith.constant 0 : index
    %6 = vector.load %arg1[%c8, %c0_3] : memref<248x128xf32, #tpu.memory_space<vmem>>, vector<4x128xf32>
    %c240 = arith.constant 240 : index
    %c0_4 = arith.constant 0 : index
    %7 = vector.load %arg1[%c240, %c0_4] : memref<248x128xf32, #tpu.memory_space<vmem>>, vector<1x128xf32>
    %c241 = arith.constant 241 : index
    %c0_5 = arith.constant 0 : index
    %8 = vector.load %arg1[%c241, %c0_5] : memref<248x128xf32, #tpu.memory_space<vmem>>, vector<1x128xf32>
    %9 = vector.extract_strided_slice %5 {offsets = [0, 0], sizes = [1, 128], strides = [1, 1]} : vector<4x128xf32> to vector<1x128xf32>
    %10 = vector.broadcast %1 : vector<8x1xf32> to vector<8x128xf32>
    %11 = vector.broadcast %9 : vector<1x128xf32> to vector<8x128xf32>
    %12 = arith.mulf %10, %11 : vector<8x128xf32>
    %13 = vector.extract_strided_slice %5 {offsets = [1, 0], sizes = [1, 128], strides = [1, 1]} : vector<4x128xf32> to vector<1x128xf32>
    %14 = vector.broadcast %2 : vector<8x1xf32> to vector<8x128xf32>
    %15 = vector.broadcast %13 : vector<1x128xf32> to vector<8x128xf32>
    %16 = arith.mulf %14, %15 : vector<8x128xf32>
    %17 = arith.addf %12, %16 : vector<8x128xf32>
    %18 = vector.extract_strided_slice %5 {offsets = [2, 0], sizes = [1, 128], strides = [1, 1]} : vector<4x128xf32> to vector<1x128xf32>
    %19 = vector.broadcast %3 : vector<8x1xf32> to vector<8x128xf32>
    %20 = vector.broadcast %18 : vector<1x128xf32> to vector<8x128xf32>
    %21 = arith.mulf %19, %20 : vector<8x128xf32>
    %22 = arith.addf %17, %21 : vector<8x128xf32>
    %23 = vector.extract_strided_slice %5 {offsets = [3, 0], sizes = [1, 128], strides = [1, 1]} : vector<4x128xf32> to vector<1x128xf32>
    %24 = vector.broadcast %4 : vector<8x1xf32> to vector<8x128xf32>
    %25 = vector.broadcast %23 : vector<1x128xf32> to vector<8x128xf32>
    %26 = arith.mulf %24, %25 : vector<8x128xf32>
    %27 = arith.addf %22, %26 : vector<8x128xf32>
    %28 = vector.broadcast %7 : vector<1x128xf32> to vector<8x128xf32>
    %29 = arith.addf %27, %28 : vector<8x128xf32>
    %cst = arith.constant 0.000000e+00 : f32
    %30 = vector.broadcast %cst : f32 to vector<8x128xf32>
    %31 = arith.cmpf oge, %29, %30 : vector<8x128xf32>
    %cst_6 = arith.constant 0.00999999977 : f32
    %32 = vector.broadcast %cst_6 : f32 to vector<8x128xf32>
    %33 = arith.mulf %32, %29 : vector<8x128xf32>
    %34 = arith.select %31, %29, %33 : vector<8x128xi1>, vector<8x128xf32>
    %35 = vector.extract_strided_slice %6 {offsets = [0, 0], sizes = [1, 128], strides = [1, 1]} : vector<4x128xf32> to vector<1x128xf32>
    %36 = vector.broadcast %1 : vector<8x1xf32> to vector<8x128xf32>
    %37 = vector.broadcast %35 : vector<1x128xf32> to vector<8x128xf32>
    %38 = arith.mulf %36, %37 : vector<8x128xf32>
    %39 = vector.extract_strided_slice %6 {offsets = [1, 0], sizes = [1, 128], strides = [1, 1]} : vector<4x128xf32> to vector<1x128xf32>
    %40 = vector.broadcast %2 : vector<8x1xf32> to vector<8x128xf32>
    %41 = vector.broadcast %39 : vector<1x128xf32> to vector<8x128xf32>
    %42 = arith.mulf %40, %41 : vector<8x128xf32>
    %43 = arith.addf %38, %42 : vector<8x128xf32>
    %44 = vector.extract_strided_slice %6 {offsets = [2, 0], sizes = [1, 128], strides = [1, 1]} : vector<4x128xf32> to vector<1x128xf32>
    %45 = vector.broadcast %3 : vector<8x1xf32> to vector<8x128xf32>
    %46 = vector.broadcast %44 : vector<1x128xf32> to vector<8x128xf32>
    %47 = arith.mulf %45, %46 : vector<8x128xf32>
    %48 = arith.addf %43, %47 : vector<8x128xf32>
    %49 = vector.extract_strided_slice %6 {offsets = [3, 0], sizes = [1, 128], strides = [1, 1]} : vector<4x128xf32> to vector<1x128xf32>
    %50 = vector.broadcast %4 : vector<8x1xf32> to vector<8x128xf32>
    %51 = vector.broadcast %49 : vector<1x128xf32> to vector<8x128xf32>
    %52 = arith.mulf %50, %51 : vector<8x128xf32>
    %53 = arith.addf %48, %52 : vector<8x128xf32>
    %54 = vector.broadcast %8 : vector<1x128xf32> to vector<8x128xf32>
    %55 = arith.addf %53, %54 : vector<8x128xf32>
    %cst_7 = arith.constant 0.000000e+00 : f32
    %56 = vector.broadcast %cst_7 : f32 to vector<8x128xf32>
    %57 = arith.cmpf oge, %55, %56 : vector<8x128xf32>
    %cst_8 = arith.constant 0.00999999977 : f32
    %58 = vector.broadcast %cst_8 : f32 to vector<8x128xf32>
    %59 = arith.mulf %58, %55 : vector<8x128xf32>
    %60 = arith.select %57, %55, %59 : vector<8x128xi1>, vector<8x128xf32>
    %61 = vector.extract_strided_slice %60 {offsets = [0, 0], sizes = [8, 32], strides = [1, 1]} : vector<8x128xf32> to vector<8x32xf32>
    %62 = tpu.concatenate %34, %61 in 1 : vector<8x128xf32>, vector<8x32xf32> -> vector<8x160xf32>
    %c16 = arith.constant 16 : index
    %c0_9 = arith.constant 0 : index
    %63 = vector.load %arg1[%c16, %c0_9] : memref<248x128xf32, #tpu.memory_space<vmem>>, vector<160x128xf32>
    %c242 = arith.constant 242 : index
    %c0_10 = arith.constant 0 : index
    %64 = vector.load %arg1[%c242, %c0_10] : memref<248x128xf32, #tpu.memory_space<vmem>>, vector<1x128xf32>
    %cst_11 = arith.constant dense<0.000000e+00> : vector<8x128xf32>
    %65 = tpu.matmul %62, %63, %cst_11 {dimension_numbers = #tpu.dot_dimension_numbers<[1], [0], [0], [1], [0, 0, 1, 1], [], []>} : vector<8x160xf32>, vector<160x128xf32>, vector<8x128xf32> -> vector<8x128xf32>
    %66 = vector.broadcast %64 : vector<1x128xf32> to vector<8x128xf32>
    %67 = arith.addf %65, %66 : vector<8x128xf32>
    %c1_i32 = arith.constant 1 : i32
    %68 = tpu.dynamic_rotate %67 by %c1_i32 dim 1 : vector<8x128xf32>, i32 -> vector<8x128xf32>
    %c127_i32 = arith.constant 127 : i32
    %69 = tpu.dynamic_rotate %67 by %c127_i32 dim 1 : vector<8x128xf32>, i32 -> vector<8x128xf32>
    %70 = arith.addf %68, %69 : vector<8x128xf32>
    %71 = arith.subf %67, %70 : vector<8x128xf32>
    %72 = math.absf %71 : vector<8x128xf32>
    %cst_12 = arith.constant 0.000000e+00 : f32
    %73 = vector.broadcast %cst_12 : f32 to vector<8x128xf32>
    %74 = arith.subf %73, %72 : vector<8x128xf32>
    %75 = math.exp %74 : vector<8x128xf32>
    %cst_13 = arith.constant 0.000000e+00 : f32
    %76 = vector.broadcast %cst_13 : f32 to vector<8x128xf32>
    %77 = arith.cmpf oge, %71, %76 : vector<8x128xf32>
    %cst_14 = arith.constant 1.000000e+00 : f32
    %78 = vector.broadcast %cst_14 : f32 to vector<8x128xf32>
    %79 = arith.addf %78, %75 : vector<8x128xf32>
    %cst_15 = arith.constant 1.000000e+00 : f32
    %80 = vector.broadcast %cst_15 : f32 to vector<8x128xf32>
    %81 = arith.divf %80, %79 : vector<8x128xf32>
    %cst_16 = arith.constant 1.000000e+00 : f32
    %82 = vector.broadcast %cst_16 : f32 to vector<8x128xf32>
    %83 = arith.addf %82, %75 : vector<8x128xf32>
    %84 = arith.divf %75, %83 : vector<8x128xf32>
    %85 = arith.select %77, %81, %84 : vector<8x128xi1>, vector<8x128xf32>
    %c245 = arith.constant 245 : index
    %c0_17 = arith.constant 0 : index
    %86 = vector.load %arg1[%c245, %c0_17] : memref<248x128xf32, #tpu.memory_space<vmem>>, vector<1x128xf32>
    %87 = vector.broadcast %86 : vector<1x128xf32> to vector<8x128xf32>
    %88 = arith.mulf %85, %87 : vector<8x128xf32>
    %cst_18 = arith.constant 0.000000e+00 : f32
    %89 = vector.broadcast %cst_18 : f32 to vector<8x128xf32>
    %90 = arith.cmpf oge, %67, %89 : vector<8x128xf32>
    %cst_19 = arith.constant 0.00999999977 : f32
    %91 = vector.broadcast %cst_19 : f32 to vector<8x128xf32>
    %92 = arith.mulf %91, %67 : vector<8x128xf32>
    %93 = arith.select %90, %67, %92 : vector<8x128xi1>, vector<8x128xf32>
    %c176 = arith.constant 176 : index
    %c0_20 = arith.constant 0 : index
    %94 = vector.load %arg1[%c176, %c0_20] : memref<248x128xf32, #tpu.memory_space<vmem>>, vector<32x128xf32>
    %c243 = arith.constant 243 : index
    %c0_21 = arith.constant 0 : index
    %95 = vector.load %arg1[%c243, %c0_21] : memref<248x128xf32, #tpu.memory_space<vmem>>, vector<1x128xf32>
    %96 = vector.extract_strided_slice %93 {offsets = [0, 0], sizes = [8, 32], strides = [1, 1]} : vector<8x128xf32> to vector<8x32xf32>
    %cst_22 = arith.constant dense<0.000000e+00> : vector<8x128xf32>
    %97 = tpu.matmul %96, %94, %cst_22 {dimension_numbers = #tpu.dot_dimension_numbers<[1], [0], [0], [1], [0, 0, 1, 1], [], []>} : vector<8x32xf32>, vector<32x128xf32>, vector<8x128xf32> -> vector<8x128xf32>
    %98 = vector.broadcast %95 : vector<1x128xf32> to vector<8x128xf32>
    %99 = arith.addf %97, %98 : vector<8x128xf32>
    %cst_23 = arith.constant 0.000000e+00 : f32
    %100 = vector.broadcast %cst_23 : f32 to vector<8x128xf32>
    %101 = arith.cmpf oge, %99, %100 : vector<8x128xf32>
    %cst_24 = arith.constant 0.00999999977 : f32
    %102 = vector.broadcast %cst_24 : f32 to vector<8x128xf32>
    %103 = arith.mulf %102, %99 : vector<8x128xf32>
    %104 = arith.select %101, %99, %103 : vector<8x128xi1>, vector<8x128xf32>
    %c208 = arith.constant 208 : index
    %c0_25 = arith.constant 0 : index
    %105 = vector.load %arg1[%c208, %c0_25] : memref<248x128xf32, #tpu.memory_space<vmem>>, vector<32x128xf32>
    %c244 = arith.constant 244 : index
    %c0_26 = arith.constant 0 : index
    %106 = vector.load %arg1[%c244, %c0_26] : memref<248x128xf32, #tpu.memory_space<vmem>>, vector<1x128xf32>
    %107 = vector.extract_strided_slice %104 {offsets = [0, 0], sizes = [8, 32], strides = [1, 1]} : vector<8x128xf32> to vector<8x32xf32>
    %cst_27 = arith.constant dense<0.000000e+00> : vector<8x128xf32>
    %108 = tpu.matmul %107, %105, %cst_27 {dimension_numbers = #tpu.dot_dimension_numbers<[1], [0], [0], [1], [0, 0, 1, 1], [], []>} : vector<8x32xf32>, vector<32x128xf32>, vector<8x128xf32> -> vector<8x128xf32>
    %109 = vector.broadcast %106 : vector<1x128xf32> to vector<8x128xf32>
    %110 = arith.addf %108, %109 : vector<8x128xf32>
    %111 = arith.addf %88, %110 : vector<8x128xf32>
    %c0_28 = arith.constant 0 : index
    %c0_29 = arith.constant 0 : index
    %112 = vector.load %arg2[%c0_28, %c0_29] : memref<8x128xf32, #tpu.memory_space<vmem>>, vector<8x128xf32>
    tpu.vector_store %arg2[%c0_28, %c0_29], %111 {strides = array<i32>} : memref<8x128xf32, #tpu.memory_space<vmem>>, vector<8x128xf32>,
    return
  }
}

</mosaic_0001>

<llo_original>
// kernel: actor_critic_forward.1
$region0: #{actor_critic_forward.1}
  #allocation0 [shape = 'u32[]', space=smem, size = 0x4, offset = 0x4, fixed_abs, tag = 'smem constant byte address 0x4 - core index']
  #allocation1 [shape = 'u32[144,128]{1,0:T(1,128)}', space=vmem, size = 0x12000, scoped, tag = 'internal scratch']
  %s0 = inlined_call_operand.vmem [shape: f32[8,4], index: 0, kind: input, shape index: {}]
  %s1 = inlined_call_operand.hbm [shape: f32[248,128], index: 1, kind: input, shape index: {}]
  %s2 = inlined_call_operand.vmem [shape: f32[8,128], index: 2, kind: output, shape index: {}]
  %s3 = sld [smem:[#allocation0]]
  $region22: #{actor_critic_forward.1} parent=0
    _
  %s5 = ssub.s32 1, %s3
  %s6 = scalar_select 0, %s5, %s3
  $region1: #{actor_critic_forward.1} parent=0
    #allocation2 [shape = 'u8[126976]{0}', space=vmem, size = 0x1f000, scoped, tag = 'input window, operand 1, single buffered']
    #allocation3 [shape = 's32[1]{0}', space=sflag, size = 0x4, scoped, tag = 'scoped memory for actor_critic_forward.1']
    %7 = vsyncpa [#allocation3], 0
    // Predicated region
    $region2: #{actor_critic_forward.1} parent=1 // pred_check
      _
    $region3: #{actor_critic_forward.1} parent=1 // pred_check_branch
      %9 = sbr.rel (0) target = $region5
    $region4: #{actor_critic_forward.1} parent=1 // pred_region
      _
    $region5: #{actor_critic_forward.1} parent=1 // pred_fallthru
      _
    // Predicated region
    $region6: #{actor_critic_forward.1} parent=1 // pred_check
      _
    $region7: #{actor_critic_forward.1} parent=1 // pred_check_branch
      %11 = sbr.rel (0) target = $region9
    $region8: #{actor_critic_forward.1} parent=1 // pred_region
      %s13 = ssub.s32 3968, 3968
      %14 = vsyncadd [#allocation3], %s13
      %s15 = sshll.u32 [#allocation2], 4
      %s16 = int_to_ptr.vmem [resolvable:$true] %s15
      %21 = dma.hbm_to_vmem [thread:$0]  %s1, 3968, %s16, [#allocation3], 128, 128, 8
    $region9: #{actor_critic_forward.1} parent=1 // pred_fallthru
      _
    // Predicated region
    $region10: #{actor_critic_forward.1} parent=1 // pred_check
      _
    $region11: #{actor_critic_forward.1} parent=1 // pred_check_branch
      %23 = sbr.rel (0) target = $region13
    $region12: #{actor_critic_forward.1} parent=1 // pred_region
      %24 = dma.done [#allocation3], 3968
    $region13: #{actor_critic_forward.1} parent=1 // pred_fallthru
      _
    %v25 = vld [vmem:[%s0] sm:$0xff]
    %v26 = vld [vmem:[#allocation2] sm:$0xf]
    %v27 = vld [vmem:[#allocation2 + $0x8] sm:$0xf]
    %v28 = vld [vmem:[#allocation2 + $0xf0] sm:$0x1]
    %v29 = vld [vmem:[#allocation2 + $0xf1] sm:$0x1]
    %31 = vset.pattern.permute.xlu0 0
    %32 = vperm.xlu0 %31, %v25
    %v33 = vpop.permute.xlu0 %32
    %v35 = vlaneseq
    %v36 = vshrl.u32 %v35, 7
    %v37 = vsub.s32 0, %v36
    %v38 = vrot.slane %v26, %v37
    %v39 = vmul.f32 %v33, %v38
    %40 = vset.pattern.permute.xlu0 1
    %41 = vperm.xlu0 %40, %v25
    %v42 = vpop.permute.xlu0 %41
    %v44 = vlaneseq
    %v45 = vshrl.u32 %v44, 7
    %v46 = vsub.s32 1, %v45
    %v47 = vrot.slane %v26, %v46
    %v48 = vmul.f32 %v42, %v47
    %v49 = vadd.f32 %v39, %v48
    %50 = vset.pattern.permute.xlu0 2
    %51 = vperm.xlu0 %50, %v25
    %v52 = vpop.permute.xlu0 %51
    %v54 = vlaneseq
    %v55 = vshrl.u32 %v54, 7
    %v56 = vsub.s32 2, %v55
    %v57 = vrot.slane %v26, %v56
    %v58 = vmul.f32 %v52, %v57
    %v59 = vadd.f32 %v49, %v58
    %60 = vset.pattern.permute.xlu0 3
    %61 = vperm.xlu0 %60, %v25
    %v62 = vpop.permute.xlu0 %61
    %v64 = vlaneseq
    %v65 = vshrl.u32 %v64, 7
    %v66 = vsub.s32 3, %v65
    %v67 = vrot.slane %v26, %v66
    %v68 = vmul.f32 %v62, %v67
    %v69 = vadd.f32 %v59, %v68
    %v70 = vlaneseq
    %v71 = vshrl.u32 %v70, 7
    %v72 = vsub.s32 0, %v71
    %v73 = vrot.slane %v28, %v72
    %v74 = vadd.f32 %v69, %v73
    %vm75 = vcmp.ge.f32.partialorder %v74, 0.0
    %v76 = vmul.f32 %v74, 0.01
    %v77 = vsel %vm75, %v74, %v76
    %v78 = vlaneseq
    %v79 = vshrl.u32 %v78, 7
    %v80 = vsub.s32 0, %v79
    %v81 = vrot.slane %v27, %v80
    %v82 = vmul.f32 %v33, %v81
    %v83 = vlaneseq
    %v84 = vshrl.u32 %v83, 7
    %v85 = vsub.s32 1, %v84
    %v86 = vrot.slane %v27, %v85
    %v87 = vmul.f32 %v42, %v86
    %v88 = vadd.f32 %v82, %v87
    %v89 = vlaneseq
    %v90 = vshrl.u32 %v89, 7
    %v91 = vsub.s32 2, %v90
    %v92 = vrot.slane %v27, %v91
    %v93 = vmul.f32 %v52, %v92
    %v94 = vadd.f32 %v88, %v93
    %v95 = vlaneseq
    %v96 = vshrl.u32 %v95, 7
    %v97 = vsub.s32 3, %v96
    %v98 = vrot.slane %v27, %v97
    %v99 = vmul.f32 %v62, %v98
    %v100 = vadd.f32 %v94, %v99
    %v101 = vlaneseq
    %v102 = vshrl.u32 %v101, 7
    %v103 = vsub.s32 0, %v102
    %v104 = vrot.slane %v29, %v103
    %v105 = vadd.f32 %v100, %v104
    %vm106 = vcmp.ge.f32.partialorder %v105, 0.0
    %v107 = vmul.f32 %v105, 0.01
    %v108 = vsel %vm106, %v105, %v107
    %v109 = vld [vmem:[#allocation2 + $0x10] sm:$0xff]
    %v110 = vld [vmem:[#allocation2 + $0x18] sm:$0xff]
    %v111 = vld [vmem:[#allocation2 + $0x20] sm:$0xff]
    %v112 = vld [vmem:[#allocation2 + $0x28] sm:$0xff]
    %v113 = vld [vmem:[#allocation2 + $0x30] sm:$0xff]
    %v114 = vld [vmem:[#allocation2 + $0x38] sm:$0xff]
    %v115 = vld [vmem:[#allocation2 + $0x40] sm:$0xff]
    %v116 = vld [vmem:[#allocation2 + $0x48] sm:$0xff]
    %v117 = vld [vmem:[#allocation2 + $0x50] sm:$0xff]
    %v118 = vld [vmem:[#allocation2 + $0x58] sm:$0xff]
    %v119 = vld [vmem:[#allocation2 + $0x60] sm:$0xff]
    %v120 = vld [vmem:[#allocation2 + $0x68] sm:$0xff]
    %v121 = vld [vmem:[#allocation2 + $0x70] sm:$0xff]
    %v122 = vld [vmem:[#allocation2 + $0x78] sm:$0xff]
    %v123 = vld [vmem:[#allocation2 + $0x80] sm:$0xff]
    %v124 = vld [vmem:[#allocation2 + $0x88] sm:$0xff]
    %v125 = vld [vmem:[#allocation2 + $0x90] sm:$0xff]
    %v126 = vld [vmem:[#allocation2 + $0x98] sm:$0xff]
    %v127 = vld [vmem:[#allocation2 + $0xa0] sm:$0xff]
    %v128 = vld [vmem:[#allocation2 + $0xa8] sm:$0xff]
    %v129 = vld [vmem:[#allocation2 + $0xf2] sm:$0x1]
    %v130 = vlaneseq
    %v131 = vshrl.u32 %v130, 7
    %v132 = vsub.s32 0, %v131
    %v133 = vrot.slane %v129, %v132
    %vm134 = vcmask 261120
    %v136 = vsel %vm134, %v108, 0
    %138 = vmatprep.subr.mxu0 0.0
    %139 = vmatpush1.msra.mxu0 %v109
    %140 = vmatprep.subr.mxu0 0.0
    %141 = vmatpush1.msra.mxu0 %v110
    %142 = vmatprep.subr.mxu0 0.0
    %143 = vmatpush1.msra.mxu0 %v111
    %144 = vmatprep.subr.mxu0 0.0
    %145 = vmatpush1.msra.mxu0 %v112
    %146 = vmatprep.subr.mxu0 0.0
    %147 = vmatpush1.msra.mxu0 %v113
    %148 = vmatprep.subr.mxu0 0.0
    %149 = vmatpush1.msra.mxu0 %v114
    %150 = vmatprep.subr.mxu0 0.0
    %151 = vmatpush1.msra.mxu0 %v115
    %152 = vmatprep.subr.mxu0 0.0
    %153 = vmatpush1.msra.mxu0 %v116
    %154 = vmatprep.subr.mxu0 0.0
    %155 = vmatpush1.msra.mxu0 %v117
    %156 = vmatprep.subr.mxu0 0.0
    %157 = vmatpush1.msra.mxu0 %v118
    %158 = vmatprep.subr.mxu0 0.0
    %159 = vmatpush1.msra.mxu0 %v119
    %160 = vmatprep.subr.mxu0 0.0
    %161 = vmatpush1.msra.mxu0 %v120
    %162 = vmatprep.subr.mxu0 0.0
    %163 = vmatpush1.msra.mxu0 %v121
    %164 = vmatprep.subr.mxu0 0.0
    %165 = vmatpush1.msra.mxu0 %v122
    %166 = vmatprep.subr.mxu0 0.0
    %167 = vmatpush1.msra.mxu0 %v123
    %168 = vmatprep.subr.mxu0 0.0
    %169 = vmatpush1.msra.mxu0 %v124
    %170 = vmatprep.subr.mxu0 0.0
    %171 = vmatpush1.msra.mxu0 %v125
    %172 = vmatprep.subr.mxu0 0.0
    %173 = vmatpush1.msra.mxu0 %v126
    %174 = vmatprep.subr.mxu0 0.0
    %175 = vmatpush1.msra.mxu0 %v127
    %176 = vmatprep.subr.mxu0 0.0
    %177 = vmatpush1.msra.mxu0 %v128
    %178 = vmatprep.subr.mxu0 0.0
    %179 = vmatpush1.msra.mxu0 0.0
    %180 = vmatprep.subr.mxu0 0.0
    %181 = vmatpush1.msra.mxu0 0.0
    %182 = vmatprep.subr.mxu0 0.0
    %183 = vmatpush1.msra.mxu0 0.0
    %184 = vmatprep.subr.mxu0 0.0
    %185 = vmatpush1.msra.mxu0 0.0
    %186 = vmatprep.subr.mxu0 0.0
    %187 = vmatpush1.msra.mxu0 0.0
    %188 = vmatprep.subr.mxu0 0.0
    %189 = vmatpush1.msra.mxu0 0.0
    %190 = vmatprep.subr.mxu0 0.0
    %191 = vmatpush1.msra.mxu0 0.0
    %192 = vmatprep.subr.mxu0 0.0
    %193 = vmatpush1.msra.mxu0 0.0
    %194 = vmatprep.subr.mxu0 0.0
    %195 = vmatpush1.msra.mxu0 0.0
    %196 = vmatprep.subr.mxu0 0.0
    %197 = vmatpush1.msra.mxu0 0.0
    %198 = vmatprep.subr.mxu0 0.0
    %199 = vmatpush1.msra.mxu0 0.0
    %200 = vmatprep.subr.mxu0 0.0
    %201 = vmatpush1.msra.mxu0 0.0
    %202 = vmatprep.mubr.f32.mxu0 %v136
    %203 = vmatmul.mubr.f32.gmra.mrb[0].mxu0 %v77
    %v204 = vpop.f32.mrb[0].mxu0
    %v205 = vadd.f32 %v133, %v204
    %v206 = vpop.f32.mrb[0].mxu0
    %207 = vdwg.mxu0
    %208 = vrot.lane.b32.xlu0 %v205, 1
    %v209 = vpop.permute.xlu0 %208
    %210 = vrot.lane.b32.xlu0 %v205, 127
    %v211 = vpop.permute.xlu0 %210
    %v212 = vadd.f32 %v209, %v211
    %v213 = vsub.f32 %v205, %v212
    %v214 = vand.u32 2147483647, %v213
    %v215 = vsub.f32 0.0, %v214
    %v216 = vmul.f32 %v215, 1.442695
    %v217 = vpow.pop %v216
    %vm218 = vcmp.ge.f32.partialorder %v213, 0.0
    %v219 = vadd.f32 %v217, 1.0
    %v220 = vrcp.pop %v219
    %v221 = vmul.f32 1.0, %v220
    %v222 = vmul.f32 %v217, %v220
    %v223 = vsel %vm218, %v221, %v222
    %v224 = vld [vmem:[#allocation2 + $0xf5] sm:$0x1]
    %v225 = vlaneseq
    %v226 = vshrl.u32 %v225, 7
    %v227 = vsub.s32 0, %v226
    %v228 = vrot.slane %v224, %v227
    %v229 = vmul.f32 %v223, %v228
    %vm230 = vcmp.ge.f32.partialorder %v205, 0.0
    %v231 = vmul.f32 %v205, 0.01
    %v232 = vsel %vm230, %v205, %v231
    %v233 = vld [vmem:[#allocation2 + $0xb0] sm:$0xff]
    %v234 = vld [vmem:[#allocation2 + $0xb8] sm:$0xff]
    %v235 = vld [vmem:[#allocation2 + $0xc0] sm:$0xff]
    %v236 = vld [vmem:[#allocation2 + $0xc8] sm:$0xff]
    %v237 = vld [vmem:[#allocation2 + $0xf3] sm:$0x1]
    %v238 = vlaneseq
    %v239 = vshrl.u32 %v238, 7
    %v240 = vsub.s32 0, %v239
    %v241 = vrot.slane %v237, %v240
    %v243 = vsel %vm134, %v232, 0
    %245 = vmatprep.subr.mxu0 0.0
    %246 = vmatpush1.msra.mxu0 %v233
    %247 = vmatprep.subr.mxu0 0.0
    %248 = vmatpush1.msra.mxu0 %v234
    %249 = vmatprep.subr.mxu0 0.0
    %250 = vmatpush1.msra.mxu0 %v235
    %251 = vmatprep.subr.mxu0 0.0
    %252 = vmatpush1.msra.mxu0 %v236
    %253 = vmatprep.subr.mxu0 0.0
    %254 = vmatpush1.msra.mxu0 0.0
    %255 = vmatprep.subr.mxu0 0.0
    %256 = vmatpush1.msra.mxu0 0.0
    %257 = vmatprep.subr.mxu0 0.0
    %258 = vmatpush1.msra.mxu0 0.0
    %259 = vmatprep.subr.mxu0 0.0
    %260 = vmatpush1.msra.mxu0 0.0
    %261 = vmatprep.subr.mxu0 0.0
    %262 = vmatpush1.msra.mxu0 0.0
    %263 = vmatprep.subr.mxu0 0.0
    %264 = vmatpush1.msra.mxu0 0.0
    %265 = vmatprep.subr.mxu0 0.0
    %266 = vmatpush1.msra.mxu0 0.0
    %267 = vmatprep.subr.mxu0 0.0
    %268 = vmatpush1.msra.mxu0 0.0
    %269 = vmatprep.subr.mxu0 0.0
    %270 = vmatpush1.msra.mxu0 0.0
    %271 = vmatprep.subr.mxu0 0.0
    %272 = vmatpush1.msra.mxu0 0.0
    %273 = vmatprep.subr.mxu0 0.0
    %274 = vmatpush1.msra.mxu0 0.0
    %275 = vmatprep.subr.mxu0 0.0
    %276 = vmatpush1.msra.mxu0 0.0
    %277 = vmatprep.subr.mxu0 0.0
    %278 = vmatpush1.msra.mxu0 0.0
    %279 = vmatprep.subr.mxu0 0.0
    %280 = vmatpush1.msra.mxu0 0.0
    %281 = vmatprep.subr.mxu0 0.0
    %282 = vmatpush1.msra.mxu0 0.0
    %283 = vmatprep.subr.mxu0 0.0
    %284 = vmatpush1.msra.mxu0 0.0
    %285 = vmatprep.subr.mxu0 0.0
    %286 = vmatpush1.msra.mxu0 0.0
    %287 = vmatprep.subr.mxu0 0.0
    %288 = vmatpush1.msra.mxu0 0.0
    %289 = vmatprep.subr.mxu0 0.0
    %290 = vmatpush1.msra.mxu0 0.0
    %291 = vmatprep.subr.mxu0 0.0
    %292 = vmatpush1.msra.mxu0 0.0
    %293 = vmatprep.subr.mxu0 0.0
    %294 = vmatpush1.msra.mxu0 0.0
    %295 = vmatprep.subr.mxu0 0.0
    %296 = vmatpush1.msra.mxu0 0.0
    %297 = vmatprep.subr.mxu0 0.0
    %298 = vmatpush1.msra.mxu0 0.0
    %299 = vmatprep.subr.mxu0 0.0
    %300 = vmatpush1.msra.mxu0 0.0
    %301 = vmatprep.subr.mxu0 0.0
    %302 = vmatpush1.msra.mxu0 0.0
    %303 = vmatprep.subr.mxu0 0.0
    %304 = vmatpush1.msra.mxu0 0.0
    %305 = vmatprep.subr.mxu0 0.0
    %306 = vmatpush1.msra.mxu0 0.0
    %307 = vmatprep.subr.mxu0 0.0
    %308 = vmatpush1.msra.mxu0 0.0
    %309 = vmatprep.mubr.f32.mxu0 0.0
    %310 = vmatmul.mubr.f32.gmra.mrb[0].mxu0 %v243
    %v311 = vpop.f32.mrb[0].mxu0
    %v312 = vadd.f32 %v241, %v311
    %v313 = vpop.f32.mrb[0].mxu0
    %314 = vdwg.mxu0
    %vm315 = vcmp.ge.f32.partialorder %v312, 0.0
    %v316 = vmul.f32 %v312, 0.01
    %v317 = vsel %vm315, %v312, %v316
    %v318 = vld [vmem:[#allocation2 + $0xd0] sm:$0xff]
    %v319 = vld [vmem:[#allocation2 + $0xd8] sm:$0xff]
    %v320 = vld [vmem:[#allocation2 + $0xe0] sm:$0xff]
    %v321 = vld [vmem:[#allocation2 + $0xe8] sm:$0xff]
    %v322 = vld [vmem:[#allocation2 + $0xf4] sm:$0x1]
    %v323 = vlaneseq
    %v324 = vshrl.u32 %v323, 7
    %v325 = vsub.s32 0, %v324
    %v326 = vrot.slane %v322, %v325
    %v328 = vsel %vm134, %v317, 0
    %330 = vmatprep.subr.mxu0 0.0
    %331 = vmatpush1.msra.mxu0 %v318
    %332 = vmatprep.subr.mxu0 0.0
    %333 = vmatpush1.msra.mxu0 %v319
    %334 = vmatprep.subr.mxu0 0.0
    %335 = vmatpush1.msra.mxu0 %v320
    %336 = vmatprep.subr.mxu0 0.0
    %337 = vmatpush1.msra.mxu0 %v321
    %338 = vmatprep.subr.mxu0 0.0
    %339 = vmatpush1.msra.mxu0 0.0
    %340 = vmatprep.subr.mxu0 0.0
    %341 = vmatpush1.msra.mxu0 0.0
    %342 = vmatprep.subr.mxu0 0.0
    %343 = vmatpush1.msra.mxu0 0.0
    %344 = vmatprep.subr.mxu0 0.0
    %345 = vmatpush1.msra.mxu0 0.0
    %346 = vmatprep.subr.mxu0 0.0
    %347 = vmatpush1.msra.mxu0 0.0
    %348 = vmatprep.subr.mxu0 0.0
    %349 = vmatpush1.msra.mxu0 0.0
    %350 = vmatprep.subr.mxu0 0.0
    %351 = vmatpush1.msra.mxu0 0.0
    %352 = vmatprep.subr.mxu0 0.0
    %353 = vmatpush1.msra.mxu0 0.0
    %354 = vmatprep.subr.mxu0 0.0
    %355 = vmatpush1.msra.mxu0 0.0
    %356 = vmatprep.subr.mxu0 0.0
    %357 = vmatpush1.msra.mxu0 0.0
    %358 = vmatprep.subr.mxu0 0.0
    %359 = vmatpush1.msra.mxu0 0.0
    %360 = vmatprep.subr.mxu0 0.0
    %361 = vmatpush1.msra.mxu0 0.0
    %362 = vmatprep.subr.mxu0 0.0
    %363 = vmatpush1.msra.mxu0 0.0
    %364 = vmatprep.subr.mxu0 0.0
    %365 = vmatpush1.msra.mxu0 0.0
    %366 = vmatprep.subr.mxu0 0.0
    %367 = vmatpush1.msra.mxu0 0.0
    %368 = vmatprep.subr.mxu0 0.0
    %369 = vmatpush1.msra.mxu0 0.0
    %370 = vmatprep.subr.mxu0 0.0
    %371 = vmatpush1.msra.mxu0 0.0
    %372 = vmatprep.subr.mxu0 0.0
    %373 = vmatpush1.msra.mxu0 0.0
    %374 = vmatprep.subr.mxu0 0.0
    %375 = vmatpush1.msra.mxu0 0.0
    %376 = vmatprep.subr.mxu0 0.0
    %377 = vmatpush1.msra.mxu0 0.0
    %378 = vmatprep.subr.mxu0 0.0
    %379 = vmatpush1.msra.mxu0 0.0
    %380 = vmatprep.subr.mxu0 0.0
    %381 = vmatpush1.msra.mxu0 0.0
    %382 = vmatprep.subr.mxu0 0.0
    %383 = vmatpush1.msra.mxu0 0.0
    %384 = vmatprep.subr.mxu0 0.0
    %385 = vmatpush1.msra.mxu0 0.0
    %386 = vmatprep.subr.mxu0 0.0
    %387 = vmatpush1.msra.mxu0 0.0
    %388 = vmatprep.subr.mxu0 0.0
    %389 = vmatpush1.msra.mxu0 0.0
    %390 = vmatprep.subr.mxu0 0.0
    %391 = vmatpush1.msra.mxu0 0.0
    %392 = vmatprep.subr.mxu0 0.0
    %393 = vmatpush1.msra.mxu0 0.0
    %394 = vmatprep.mubr.f32.mxu0 0.0
    %395 = vmatmul.mubr.f32.gmra.mrb[0].mxu0 %v328
    %v396 = vpop.f32.mrb[0].mxu0
    %v397 = vadd.f32 %v326, %v396
    %v398 = vpop.f32.mrb[0].mxu0
    %399 = vdwg.mxu0
    %v400 = vadd.f32 %v229, %v397
    %401 = vst [vmem:[%s2] sm:$0xff] %v400
    // Predicated region
    $region14: #{actor_critic_forward.1} parent=1 // pred_check
      _
    $region15: #{actor_critic_forward.1} parent=1 // pred_check_branch
      %403 = sbr.rel (0) target = $region17
    $region16: #{actor_critic_forward.1} parent=1 // pred_region
      _
    $region17: #{actor_critic_forward.1} parent=1 // pred_fallthru
      _
    // Predicated region
    $region18: #{actor_critic_forward.1} parent=1 // pred_check
      _
    $region19: #{actor_critic_forward.1} parent=1 // pred_check_branch
      %405 = sbr.rel (0) target = $region21
    $region20: #{actor_critic_forward.1} parent=1 // pred_region
      _
    $region21: #{actor_critic_forward.1} parent=1 // pred_fallthru
      _
    %406 = vsyncpa [#allocation3], 1

</llo_original>
